<compile_context>
chip_gen: v5e
topology: v5e:2x2
jax: 0.10.0
libtpu: 0.0.40
codegen_flags: <defaults>
</compile_context>

<pallas_src>
import functools

import jax
import jax.numpy as jnp
from jax.experimental import pallas as pl
from jax.experimental.pallas import tpu as pltpu

LANE = 128


def _round_up(n, m):
    return ((n + m - 1) // m) * m


def simplenet_kernel(x_ref, w1_ref, b1_ref, w2_ref, b2_ref, o_ref):
    # Cast x to bf16 in-kernel (free VPU op hidden under the DMA).
    x_bf16 = x_ref[...].astype(jnp.bfloat16)
    # fc1: (TB, IN)bf16 @ (IN, HID_P)bf16 -> f32 accumulate on the MXU.
    h = jnp.dot(x_bf16, w1_ref[...], preferred_element_type=jnp.float32)
    # Bias + ReLU in f32 on the VPU.
    h = jnp.maximum(h + b1_ref[...], 0.0)
    # fc2: bf16 operands, f32 accumulate.
    out = jnp.dot(h.astype(jnp.bfloat16), w2_ref[...],
                  preferred_element_type=jnp.float32)
    o_ref[...] = (out + b2_ref[...]).astype(o_ref.dtype)


def prepare_simplenet_params(w1, b1, w2, b2):
    """One-time prep: pad N/class dims to lane multiples, cast weights to bf16.

    Zero-padded rows/cols contribute exactly 0 to the matmuls, and padded
    hidden columns of h are ReLU(0 + 0) = 0, so results are unaffected.
    """
    in_dim, hid = w1.shape
    ncls = w2.shape[1]
    hid_p = _round_up(hid, LANE)
    cls_p = _round_up(ncls, LANE)

    w1p = jnp.zeros((in_dim, hid_p), jnp.bfloat16).at[:, :hid].set(
        w1.astype(jnp.bfloat16))
    b1p = jnp.zeros((1, hid_p), jnp.float32).at[0, :hid].set(
        b1.reshape(-1).astype(jnp.float32))
    w2p = jnp.zeros((hid_p, cls_p), jnp.bfloat16).at[:hid, :ncls].set(
        w2.astype(jnp.bfloat16))
    b2p = jnp.zeros((1, cls_p), jnp.float32).at[0, :ncls].set(
        b2.reshape(-1).astype(jnp.float32))
    return w1p, b1p, w2p, b2p


def simplenet_forward(x, w1p, b1p, w2p, b2p, num_classes, *, block_b=2048):
    """x:(B,in) f32; padded params from prepare_simplenet_params; -> (B,num_classes)."""
    B, in_dim = x.shape
    hid_p = w1p.shape[1]
    cls_p = w2p.shape[1]

    # Balanced batch tiling (multiple of 8 sublanes).
    block_b = max(8, _round_up(block_b, 8))
    n_steps = (B + block_b - 1) // block_b
    if n_steps == 1 and B > 64:
        n_steps = 2                      # give both v7x TensorCores work
    tb = _round_up((B + n_steps - 1) // n_steps, 8)
    b_p = tb * n_steps

    # Only pad the batch dim of x (cheap, often a no-op); no K padding,
    # no bf16 copy in HBM.
    xb = x if b_p == B else jnp.pad(x, ((0, b_p - B), (0, 0)))

    out_p = pl.pallas_call(
        simplenet_kernel,
        out_shape=jax.ShapeDtypeStruct((b_p, cls_p), jnp.float32),
        grid_spec=pl.GridSpec(
            grid=(n_steps,),
            in_specs=[
                pl.BlockSpec((tb, in_dim), lambda i: (i, 0)),    # x batch tile
                pl.BlockSpec((in_dim, hid_p), lambda i: (0, 0)),  # w1 resident
                pl.BlockSpec((1, hid_p), lambda i: (0, 0)),       # b1 resident
                pl.BlockSpec((hid_p, cls_p), lambda i: (0, 0)),   # w2 resident
                pl.BlockSpec((1, cls_p), lambda i: (0, 0)),       # b2 resident
            ],
            out_specs=pl.BlockSpec((tb, cls_p), lambda i: (i, 0)),
        ),
        compiler_params=pltpu.CompilerParams(
            dimension_semantics=("parallel",)),
    )(xb, w1p, b1p, w2p, b2p)

    # Drop batch/class padding; return in the input dtype.
    return out_p[:B, :num_classes].astype(x.dtype)


def reference_forward_f32(x, w1, b1, w2, b2):
    h = jnp.maximum(x @ w1 + b1, 0.0)
    return h @ w2 + b2


def reference_forward_bf16(x, w1, b1, w2, b2):
    # Same bf16-operand / f32-accumulate recipe as the kernel, for a tight check.
    h = jnp.dot(x.astype(jnp.bfloat16), w1.astype(jnp.bfloat16),
                preferred_element_type=jnp.float32) + b1
    h = jnp.maximum(h, 0.0)
    out = jnp.dot(h.astype(jnp.bfloat16), w2.astype(jnp.bfloat16),
                  preferred_element_type=jnp.float32) + b2
    return out


if __name__ == "__main__":
    # Small shapes implied by the module: Linear(input, hidden) -> ReLU -> Linear.
    batch, input_size, hidden_size, num_classes = 8, 32, 64, 16

    key = jax.random.PRNGKey(0)
    kx, kw1, kb1, kw2, kb2 = jax.random.split(key, 5)

    x = jax.random.normal(kx, (batch, input_size), dtype=jnp.float32)

    # Deterministic parameter init (PyTorch-style uniform bounds).
    bound1 = 1.0 / (input_size ** 0.5)
    w1 = jax.random.uniform(kw1, (input_size, hidden_size),
                            minval=-bound1, maxval=bound1, dtype=jnp.float32)
    b1 = jax.random.uniform(kb1, (hidden_size,),
                            minval=-bound1, maxval=bound1, dtype=jnp.float32)

    bound2 = 1.0 / (hidden_size ** 0.5)
    w2 = jax.random.uniform(kw2, (hidden_size, num_classes),
                            minval=-bound2, maxval=bound2, dtype=jnp.float32)
    b2 = jax.random.uniform(kb2, (num_classes,),
                            minval=-bound2, maxval=bound2, dtype=jnp.float32)

    # One-time parameter prep (padding + bf16 casts hoisted out of forward).
    params = jax.block_until_ready(prepare_simplenet_params(w1, b1, w2, b2))

    fwd = jax.jit(functools.partial(simplenet_forward,
                                    num_classes=num_classes))

    out = jax.block_until_ready(fwd(x, *params))
    assert out.shape == (batch, num_classes)

    # Tight check against a reference using the same bf16/f32 recipe.
    ref_bf16 = reference_forward_bf16(x, w1, b1, w2, b2)
    assert jnp.allclose(out, ref_bf16, atol=1e-3, rtol=1e-3), \
        float(jnp.max(jnp.abs(out - ref_bf16)))
    # Loose sanity check against the pure-f32 reference (bf16 rounding only).
    ref_f32 = reference_forward_f32(x, w1, b1, w2, b2)
    assert jnp.allclose(out, ref_f32, atol=5e-2, rtol=5e-2)

    # Exercise the multi-grid-step, padded-batch path as well (1000 rows ->
    # 2 balanced tiles of 504 rows; batch padded only by 8 rows).
    xb = jax.random.normal(kx, (1000, input_size), dtype=jnp.float32)
    outb = jax.block_until_ready(fwd(xb, *params))
    assert outb.shape == (1000, num_classes)
    refb = reference_forward_bf16(xb, w1, b1, w2, b2)
    assert jnp.allclose(outb, refb, atol=1e-3, rtol=1e-3)

    # Also exercise a >2-step grid with a user-supplied (non-multiple-of-8)
    # block size that must be rounded up defensively.
    fwd_small_tiles = jax.jit(functools.partial(
        simplenet_forward, num_classes=num_classes, block_b=250))
    outc = jax.block_until_ready(fwd_small_tiles(xb, *params))
    assert jnp.allclose(outc, refb, atol=1e-3, rtol=1e-3)

    print("KERNEL_OK")
</pallas_src>

<mosaic_0001>
module attributes {stable_mosaic.version = 11 : i64} {
  func.func @simplenet_kernel(%arg0: i32, %arg1: memref<8x32xf32, #tpu.memory_space<vmem>>, %arg2: memref<32x128xbf16, #tpu.memory_space<vmem>>, %arg3: memref<1x128xf32, #tpu.memory_space<vmem>>, %arg4: memref<128x128xbf16, #tpu.memory_space<vmem>>, %arg5: memref<1x128xf32, #tpu.memory_space<vmem>>, %arg6: memref<8x128xf32, #tpu.memory_space<vmem>>) attributes {dimension_semantics = [#tpu.dimension_semantics<parallel>], iteration_bounds = array<i64: 1>, scalar_prefetch = 0 : i64, scratch_operands = 0 : i64, tpu.core_type = #tpu.core_type<tc>, window_params = [{transform_indices = @transform_0, window_bounds = array<i64: 8, 32>}, {pipeline_mode = #tpu.pipeline_mode<synchronous>, transform_indices = @transform_1, window_bounds = array<i64: 32, 128>}, {pipeline_mode = #tpu.pipeline_mode<synchronous>, transform_indices = @transform_2, window_bounds = array<i64: 1, 128>}, {pipeline_mode = #tpu.pipeline_mode<synchronous>, transform_indices = @transform_3, window_bounds = array<i64: 128, 128>}, {pipeline_mode = #tpu.pipeline_mode<synchronous>, transform_indices = @transform_4, window_bounds = array<i64: 1, 128>}, {transform_indices = @transform_5, window_bounds = array<i64: 8, 128>}]} {
    %c0 = arith.constant 0 : index
    %c0_0 = arith.constant 0 : index
    %0 = vector.load %arg1[%c0, %c0_0] : memref<8x32xf32, #tpu.memory_space<vmem>>, vector<8x32xf32>
    %1 = arith.truncf %0 : vector<8x32xf32> to vector<8x32xbf16>
    %c0_1 = arith.constant 0 : index
    %c0_2 = arith.constant 0 : index
    %2 = vector.load %arg2[%c0_1, %c0_2] : memref<32x128xbf16, #tpu.memory_space<vmem>>, vector<32x128xbf16>
    %cst = arith.constant dense<0.000000e+00> : vector<8x128xf32>
    %3 = tpu.matmul %1, %2, %cst {dimension_numbers = #tpu.dot_dimension_numbers<[1], [0], [0], [1], [0, 0, 1, 1], [], []>} : vector<8x32xbf16>, vector<32x128xbf16>, vector<8x128xf32> -> vector<8x128xf32>
    %c0_3 = arith.constant 0 : index
    %c0_4 = arith.constant 0 : index
    %4 = vector.load %arg3[%c0_3, %c0_4] : memref<1x128xf32, #tpu.memory_space<vmem>>, vector<1x128xf32>
    %5 = vector.broadcast %4 : vector<1x128xf32> to vector<8x128xf32>
    %6 = arith.addf %3, %5 : vector<8x128xf32>
    %cst_5 = arith.constant 0.000000e+00 : f32
    %7 = vector.broadcast %cst_5 : f32 to vector<8x128xf32>
    %8 = arith.maximumf %6, %7 : vector<8x128xf32>
    %9 = arith.truncf %8 : vector<8x128xf32> to vector<8x128xbf16>
    %c0_6 = arith.constant 0 : index
    %c0_7 = arith.constant 0 : index
    %10 = vector.load %arg4[%c0_6, %c0_7] : memref<128x128xbf16, #tpu.memory_space<vmem>>, vector<128x128xbf16>
    %cst_8 = arith.constant dense<0.000000e+00> : vector<8x128xf32>
    %11 = tpu.matmul %9, %10, %cst_8 {dimension_numbers = #tpu.dot_dimension_numbers<[1], [0], [0], [1], [0, 0, 1, 1], [], []>} : vector<8x128xbf16>, vector<128x128xbf16>, vector<8x128xf32> -> vector<8x128xf32>
    %c0_9 = arith.constant 0 : index
    %c0_10 = arith.constant 0 : index
    %12 = vector.load %arg5[%c0_9, %c0_10] : memref<1x128xf32, #tpu.memory_space<vmem>>, vector<1x128xf32>
    %13 = vector.broadcast %12 : vector<1x128xf32> to vector<8x128xf32>
    %14 = arith.addf %11, %13 : vector<8x128xf32>
    %c0_11 = arith.constant 0 : index
    %c0_12 = arith.constant 0 : index
    %15 = vector.load %arg6[%c0_11, %c0_12] : memref<8x128xf32, #tpu.memory_space<vmem>>, vector<8x128xf32>
    tpu.vector_store %arg6[%c0_11, %c0_12], %14 {strides = array<i32>} : memref<8x128xf32, #tpu.memory_space<vmem>>, vector<8x128xf32>,
    return
  }
  func.func @transform_0(%arg0: i32) -> (i32, i32) {
    %c0_i32 = arith.constant 0 : i32
    %c0_i32_0 = arith.constant 0 : i32
    return %arg0, %c0_i32 : i32, i32
  }
  func.func @transform_1(%arg0: i32) -> (i32, i32) {
    %c0_i32 = arith.constant 0 : i32
    %c0_i32_0 = arith.constant 0 : i32
    %c0_i32_1 = arith.constant 0 : i32
    return %c0_i32, %c0_i32_0 : i32, i32
  }
  func.func @transform_2(%arg0: i32) -> (i32, i32) {
    %c0_i32 = arith.constant 0 : i32
    %c0_i32_0 = arith.constant 0 : i32
    %c0_i32_1 = arith.constant 0 : i32
    return %c0_i32, %c0_i32_0 : i32, i32
  }
  func.func @transform_3(%arg0: i32) -> (i32, i32) {
    %c0_i32 = arith.constant 0 : i32
    %c0_i32_0 = arith.constant 0 : i32
    %c0_i32_1 = arith.constant 0 : i32
    return %c0_i32, %c0_i32_0 : i32, i32
  }
  func.func @transform_4(%arg0: i32) -> (i32, i32) {
    %c0_i32 = arith.constant 0 : i32
    %c0_i32_0 = arith.constant 0 : i32
    %c0_i32_1 = arith.constant 0 : i32
    return %c0_i32, %c0_i32_0 : i32, i32
  }
  func.func @transform_5(%arg0: i32) -> (i32, i32) {
    %c0_i32 = arith.constant 0 : i32
    %c0_i32_0 = arith.constant 0 : i32
    return %arg0, %c0_i32 : i32, i32
  }
}

</mosaic_0001>

<llo_original>
// kernel: simplenet_forward.1
$region0: #{simplenet_forward.1}
  #allocation0 [shape = 'u32[]', space=smem, size = 0x4, offset = 0x4, fixed_abs, tag = 'smem constant byte address 0x4 - core index']
  #allocation1 [shape = 'u32[72,128]{1,0:T(1,128)}', space=vmem, size = 0x9000, scoped, tag = 'internal scratch']
  %s0 = inlined_call_operand.hbm [shape: f32[8,32], index: 0, kind: input, shape index: {}]
  %s1 = inlined_call_operand.hbm [shape: bf16[32,128], index: 1, kind: input, shape index: {}]
  %s2 = inlined_call_operand.vmem [shape: f32[1,128], index: 2, kind: input, shape index: {}]
  %s3 = inlined_call_operand.hbm [shape: bf16[128,128], index: 3, kind: input, shape index: {}]
  %s4 = inlined_call_operand.vmem [shape: f32[1,128], index: 4, kind: input, shape index: {}]
  %s5 = inlined_call_operand.hbm [shape: f32[8,128], index: 5, kind: output, shape index: {}]
  %s6 = sld [smem:[#allocation0]]
  $region42: #{simplenet_forward.1} parent=0
    _
  %s8 = ssub.s32 1, %s6
  %s9 = scalar_select 0, %s8, %s6
  $region1: #{simplenet_forward.1} parent=0
    #allocation2 [shape = 'u8[4096]{0}', space=vmem, size = 0x1000, scoped, tag = 'input window, operand 0, single buffered']
    #allocation3 [shape = 's32[1]{0}', space=sflag, size = 0x4, scoped, tag = 'scoped memory for simplenet_forward.1']
    #allocation4 [shape = 's32[1]{0}', space=sflag, size = 0x4, scoped, tag = 'scoped memory for simplenet_forward.1']
    #allocation5 [shape = 'u8[8192]{0}', space=vmem, size = 0x2000, scoped, tag = 'input window, operand 1, single buffered']
    #allocation6 [shape = 's32[1]{0}', space=sflag, size = 0x4, scoped, tag = 'scoped memory for simplenet_forward.1']
    #allocation7 [shape = 'u8[32768]{0}', space=vmem, size = 0x8000, scoped, tag = 'input window, operand 3, single buffered']
    #allocation8 [shape = 'u8[4096]{0}', space=vmem, size = 0x1000, scoped, tag = 'output window, operand 0, single buffered']
    %10 = vsyncpa [#allocation3], 0
    %11 = vsyncpa [#allocation6], 0
    %12 = vsyncpa [#allocation4], 0
    // Predicated region
    $region2: #{simplenet_forward.1} parent=1 // pred_check
      _
    $region3: #{simplenet_forward.1} parent=1 // pred_check_branch
      %14 = sbr.rel (0) target = $region5
    $region4: #{simplenet_forward.1} parent=1 // pred_region
      %16 = vsyncadd [#allocation3], 0
      %s18 = sshll.u32 %s0, 4
      %s19 = int_to_ptr.hbm [resolvable:$true] %s18
      %s20 = sshll.u32 [#allocation2], 4
      %s21 = int_to_ptr.vmem [resolvable:$true] %s20
      %23 = dma.hbm_to_vmem [thread:$0]  %s19, 128, %s21, [#allocation3]
    $region5: #{simplenet_forward.1} parent=1 // pred_fallthru
      _
    // Predicated region
    $region6: #{simplenet_forward.1} parent=1 // pred_check
      _
    $region7: #{simplenet_forward.1} parent=1 // pred_check_branch
      %25 = sbr.rel (0) target = $region9
    $region8: #{simplenet_forward.1} parent=1 // pred_region
      %27 = vsyncadd [#allocation6], 0
      %s28 = sshll.u32 %s1, 4
      %s29 = int_to_ptr.hbm [resolvable:$true] %s28
      %s30 = sshll.u32 [#allocation5], 4
      %s31 = int_to_ptr.vmem [resolvable:$true] %s30
      %36 = dma.hbm_to_vmem [thread:$0]  %s29, 256, %s31, [#allocation6], 64, 64, 4
    $region9: #{simplenet_forward.1} parent=1 // pred_fallthru
      _
    // Predicated region
    $region10: #{simplenet_forward.1} parent=1 // pred_check
      _
    $region11: #{simplenet_forward.1} parent=1 // pred_check_branch
      %38 = sbr.rel (0) target = $region13
    $region12: #{simplenet_forward.1} parent=1 // pred_region
      _
    $region13: #{simplenet_forward.1} parent=1 // pred_fallthru
      _
    // Predicated region
    $region14: #{simplenet_forward.1} parent=1 // pred_check
      _
    $region15: #{simplenet_forward.1} parent=1 // pred_check_branch
      %40 = sbr.rel (0) target = $region17
    $region16: #{simplenet_forward.1} parent=1 // pred_region
      %42 = vsyncadd [#allocation6], 0
      %s43 = sshll.u32 %s3, 4
      %s44 = int_to_ptr.hbm [resolvable:$true] %s43
      %s45 = sshll.u32 [#allocation7], 4
      %s46 = int_to_ptr.vmem [resolvable:$true] %s45
      %51 = dma.hbm_to_vmem [thread:$0]  %s44, 1024, %s46, [#allocation6], 64, 64, 4
    $region17: #{simplenet_forward.1} parent=1 // pred_fallthru
      _
    // Predicated region
    $region18: #{simplenet_forward.1} parent=1 // pred_check
      _
    $region19: #{simplenet_forward.1} parent=1 // pred_check_branch
      %53 = sbr.rel (0) target = $region21
    $region20: #{simplenet_forward.1} parent=1 // pred_region
      _
    $region21: #{simplenet_forward.1} parent=1 // pred_fallthru
      _
    // Predicated region
    $region22: #{simplenet_forward.1} parent=1 // pred_check
      _
    $region23: #{simplenet_forward.1} parent=1 // pred_check_branch
      %55 = sbr.rel (0) target = $region25
    $region24: #{simplenet_forward.1} parent=1 // pred_region
      %57 = dma.done [#allocation3], 128
    $region25: #{simplenet_forward.1} parent=1 // pred_fallthru
      _
    // Predicated region
    $region26: #{simplenet_forward.1} parent=1 // pred_check
      _
    $region27: #{simplenet_forward.1} parent=1 // pred_check_branch
      %59 = sbr.rel (0) target = $region29
    $region28: #{simplenet_forward.1} parent=1 // pred_region
      %61 = dma.done [#allocation6], 256
    $region29: #{simplenet_forward.1} parent=1 // pred_fallthru
      _
    // Predicated region
    $region30: #{simplenet_forward.1} parent=1 // pred_check
      _
    $region31: #{simplenet_forward.1} parent=1 // pred_check_branch
      %63 = sbr.rel (0) target = $region33
    $region32: #{simplenet_forward.1} parent=1 // pred_region
      %65 = dma.done [#allocation6], 1024
    $region33: #{simplenet_forward.1} parent=1 // pred_fallthru
      _
    %v67 = vld [vmem:[#allocation2] sm:$0xff]
    %v68 = vpack.c.bf16 %v67, %v67
    %v69 = vld [vmem:[#allocation5] sm:$0xf]
    %v70 = vld [vmem:[#allocation5 + $0x4] sm:$0xf]
    %v71 = vld [vmem:[#allocation5 + $0x8] sm:$0xf]
    %v72 = vld [vmem:[#allocation5 + $0xc] sm:$0xf]
    %v73 = vld [vmem:[%s2] sm:$0x1]
    %v75 = vperm.slane %v73, 0
    %v81 = vunpack.c.l.b16 %v69
    %v82 = vunpack.c.l.b16 %v70
    %v83 = vunpack.c.l.b16 %v71
    %v84 = vunpack.c.l.b16 %v72
    %v85 = vpack.c.b16 %v82, %v81
    %v86 = vpack.c.b16 %v84, %v83
    %vm89 = vcmask 261120
    %v91 = vsel %vm89, %v68, 0
    %93 = vmatpush.bf16.msra.mxu0 0
    %94 = vmatpush.bf16.msra.mxu0 0
    %95 = vmatpush.bf16.msra.mxu0 0
    %96 = vmatpush.bf16.msra.mxu0 0
    %97 = vmatpush.bf16.msra.mxu0 0
    %98 = vmatpush.bf16.msra.mxu0 0
    %99 = vmatpush.bf16.msra.mxu0 %v86
    %100 = vmatpush.bf16.msra.mxu0 %v85
    %101 = vmatmul.bf16.gmra.mxu0 %v91
    %v102 = vpop.f32.mrf.mxu0
    %v103 = vadd.f32 %v75, %v102
    %v104 = vpop.f32.mrf.mxu0
    %105 = vdwg.mxu0
    %v106 = vmax.f32 %v103, 0.0
    %v107 = vpack.c.bf16 %v106, %v106
    %v108 = vld [vmem:[#allocation7] sm:$0xf]
    %v109 = vld [vmem:[#allocation7 + $0x4] sm:$0xf]
    %v110 = vld [vmem:[#allocation7 + $0x8] sm:$0xf]
    %v111 = vld [vmem:[#allocation7 + $0xc] sm:$0xf]
    %v112 = vld [vmem:[#allocation7 + $0x10] sm:$0xf]
    %v113 = vld [vmem:[#allocation7 + $0x14] sm:$0xf]
    %v114 = vld [vmem:[#allocation7 + $0x18] sm:$0xf]
    %v115 = vld [vmem:[#allocation7 + $0x1c] sm:$0xf]
    %v116 = vld [vmem:[#allocation7 + $0x20] sm:$0xf]
    %v117 = vld [vmem:[#allocation7 + $0x24] sm:$0xf]
    %v118 = vld [vmem:[#allocation7 + $0x28] sm:$0xf]
    %v119 = vld [vmem:[#allocation7 + $0x2c] sm:$0xf]
    %v120 = vld [vmem:[#allocation7 + $0x30] sm:$0xf]
    %v121 = vld [vmem:[#allocation7 + $0x34] sm:$0xf]
    %v122 = vld [vmem:[#allocation7 + $0x38] sm:$0xf]
    %v123 = vld [vmem:[#allocation7 + $0x3c] sm:$0xf]
    %v124 = vld [vmem:[%s4] sm:$0x1]
    %v126 = vperm.slane %v124, 0
    %v144 = vunpack.c.l.b16 %v108
    %v145 = vunpack.c.l.b16 %v109
    %v146 = vunpack.c.l.b16 %v110
    %v147 = vunpack.c.l.b16 %v111
    %v148 = vunpack.c.l.b16 %v112
    %v149 = vunpack.c.l.b16 %v113
    %v150 = vunpack.c.l.b16 %v114
    %v151 = vunpack.c.l.b16 %v115
    %v152 = vunpack.c.l.b16 %v116
    %v153 = vunpack.c.l.b16 %v117
    %v154 = vunpack.c.l.b16 %v118
    %v155 = vunpack.c.l.b16 %v119
    %v156 = vunpack.c.l.b16 %v120
    %v157 = vunpack.c.l.b16 %v121
    %v158 = vunpack.c.l.b16 %v122
    %v159 = vunpack.c.l.b16 %v123
    %v160 = vpack.c.b16 %v145, %v144
    %v161 = vpack.c.b16 %v147, %v146
    %v162 = vpack.c.b16 %v149, %v148
    %v163 = vpack.c.b16 %v151, %v150
    %v164 = vpack.c.b16 %v153, %v152
    %v165 = vpack.c.b16 %v155, %v154
    %v166 = vpack.c.b16 %v157, %v156
    %v167 = vpack.c.b16 %v159, %v158
    %176 = vmatpush.bf16.msra.mxu0 %v167
    %177 = vmatpush.bf16.msra.mxu0 %v166
    %178 = vmatpush.bf16.msra.mxu0 %v165
    %179 = vmatpush.bf16.msra.mxu0 %v164
    %180 = vmatpush.bf16.msra.mxu0 %v163
    %181 = vmatpush.bf16.msra.mxu0 %v162
    %182 = vmatpush.bf16.msra.mxu0 %v161
    %183 = vmatpush.bf16.msra.mxu0 %v160
    %184 = vmatmul.bf16.gmra.mxu0 %v107
    %v185 = vpop.f32.mrf.mxu0
    %v186 = vadd.f32 %v126, %v185
    %v187 = vpop.f32.mrf.mxu0
    %188 = vdwg.mxu0
    %189 = vst [vmem:[#allocation8] sm:$0xff] %v186
    // Predicated region
    $region34: #{simplenet_forward.1} parent=1 // pred_check
      _
    $region35: #{simplenet_forward.1} parent=1 // pred_check_branch
      %191 = sbr.rel (0) target = $region37
    $region36: #{simplenet_forward.1} parent=1 // pred_region
      %193 = vsyncadd [#allocation4], 0
      %s195 = sshll.u32 [#allocation8], 4
      %s196 = int_to_ptr.vmem [resolvable:$true] %s195
      %s197 = sshll.u32 %s5, 4
      %s198 = int_to_ptr.hbm [resolvable:$true] %s197
      %200 = dma.vmem_to_hbm [thread:$0]  %s196, 128, %s198, [#allocation4]
    $region37: #{simplenet_forward.1} parent=1 // pred_fallthru
      _
    // Predicated region
    $region38: #{simplenet_forward.1} parent=1 // pred_check
      _
    $region39: #{simplenet_forward.1} parent=1 // pred_check_branch
      %202 = sbr.rel (0) target = $region41
    $region40: #{simplenet_forward.1} parent=1 // pred_region
      %204 = dma.done [#allocation4], 128
    $region41: #{simplenet_forward.1} parent=1 // pred_fallthru
      _
    %205 = vsyncpa [#allocation3], 1
    %206 = vsyncpa [#allocation6], 1
    %207 = vsyncpa [#allocation4], 1

</llo_original>
